<compile_context>
chip_gen: v7x
topology: tpu7x:2x2x1
jax: 0.10.0
libtpu: 0.0.40
codegen_flags: <defaults>
</compile_context>

<pallas_src>
import jax
import jax.numpy as jnp
from jax.experimental import pallas as pl
from jax.experimental.pallas import tpu as pltpu  # noqa: F401  (kept for TPU-specific tuning hooks)

EPS = 1e-5


def _row_sum(v):
    """Sum over the last (lane) axis of a (R, C) f32 array.

    If C is a multiple of 128, fold with aligned VALU adds first so only a
    single 128-lane cross-lane (XLU) reduction remains per row.
    """
    c = v.shape[-1]
    if c % 128 == 0 and c // 128 >= 2:
        n = c // 128
        acc = v[:, 0:128]
        for k in range(1, n):
            acc = acc + v[:, k * 128:(k + 1) * 128]
        return jnp.sum(acc, axis=-1, keepdims=True)
    return jnp.sum(v, axis=-1, keepdims=True)


def layernorm_kernel(x_ref, gamma_ref, beta_ref, o_ref):
    # x_ref: (R, C) f32 in VMEM; gamma/beta: (1, C) — broadcast along rows.
    x = x_ref[...]
    inv_c = 1.0 / x.shape[-1]
    mean = _row_sum(x) * inv_c
    d = x - mean
    var = _row_sum(d * d) * inv_c          # centered variance (PyTorch LN)
    inv = jax.lax.rsqrt(var + EPS)         # EUP slot, effectively free
    o_ref[...] = (d * inv * gamma_ref[...] + beta_ref[...]).astype(o_ref.dtype)


def layernorm(x, gamma, beta):
    """x: (N, H, W, C); gamma, beta: (C,). LayerNorm over the last dim."""
    N, H, W, C = x.shape
    rows = N * H * W
    x2 = x.reshape(rows, C)
    g2 = gamma.reshape(1, C)
    b2 = beta.reshape(1, C)

    out = pl.pallas_call(
        layernorm_kernel,
        out_shape=jax.ShapeDtypeStruct((rows, C), x.dtype),
        # Single full-array block, no grid: one launch, no padding, no slicing.
        in_specs=[
            pl.BlockSpec((rows, C), lambda: (0, 0)),
            pl.BlockSpec((1, C), lambda: (0, 0)),
            pl.BlockSpec((1, C), lambda: (0, 0)),
        ],
        out_specs=pl.BlockSpec((rows, C), lambda: (0, 0)),
    )(x2, g2, b2)

    return out.reshape(N, H, W, C)


if __name__ == "__main__":
    key = jax.random.PRNGKey(0)
    k1, k2, k3 = jax.random.split(key, 3)

    N, H, W, C = 1, 14, 14, 512
    x = jax.random.normal(k1, (N, H, W, C), dtype=jnp.float32)
    # elementwise_affine params (PyTorch init: gamma=1, beta=0; perturb so the
    # affine path is actually exercised).
    gamma = jnp.ones((C,), dtype=jnp.float32) + 0.01 * jax.random.normal(k2, (C,), dtype=jnp.float32)
    beta = 0.01 * jax.random.normal(k3, (C,), dtype=jnp.float32)

    y = layernorm(x, gamma, beta)
    y = jax.block_until_ready(y)

    # Reference check in plain JAX.
    mean = jnp.mean(x, axis=-1, keepdims=True)
    var = jnp.mean((x - mean) ** 2, axis=-1, keepdims=True)
    ref = (x - mean) * jax.lax.rsqrt(var + EPS) * gamma + beta
    assert y.shape == (N, H, W, C)
    assert jnp.max(jnp.abs(y - ref)) < 1e-4

    print("KERNEL_OK")
</pallas_src>

<mosaic_0001>
module attributes {stable_mosaic.version = 11 : i64} {
  func.func @layernorm_kernel(%arg0: memref<196x512xf32, #tpu.memory_space<vmem>>, %arg1: memref<1x512xf32, #tpu.memory_space<vmem>>, %arg2: memref<1x512xf32, #tpu.memory_space<vmem>>, %arg3: memref<196x512xf32, #tpu.memory_space<vmem>>) attributes {dimension_semantics = [], scalar_prefetch = 0 : i64, scratch_operands = 0 : i64, tpu.core_type = #tpu.core_type<tc>} {
    %c0 = arith.constant 0 : index
    %c0_0 = arith.constant 0 : index
    %0 = vector.load %arg0[%c0, %c0_0] : memref<196x512xf32, #tpu.memory_space<vmem>>, vector<196x512xf32>
    %1 = vector.extract_strided_slice %0 {offsets = [0, 0], sizes = [196, 128], strides = [1, 1]} : vector<196x512xf32> to vector<196x128xf32>
    %2 = vector.extract_strided_slice %0 {offsets = [0, 128], sizes = [196, 128], strides = [1, 1]} : vector<196x512xf32> to vector<196x128xf32>
    %3 = arith.addf %1, %2 : vector<196x128xf32>
    %4 = vector.extract_strided_slice %0 {offsets = [0, 256], sizes = [196, 128], strides = [1, 1]} : vector<196x512xf32> to vector<196x128xf32>
    %5 = arith.addf %3, %4 : vector<196x128xf32>
    %6 = vector.extract_strided_slice %0 {offsets = [0, 384], sizes = [196, 128], strides = [1, 1]} : vector<196x512xf32> to vector<196x128xf32>
    %7 = arith.addf %5, %6 : vector<196x128xf32>
    %cst = arith.constant dense<0.000000e+00> : vector<196xf32>
    %8 = vector.multi_reduction <add>, %7, %cst [1] : vector<196x128xf32> to vector<196xf32>
    %9 = vector.shape_cast %8 : vector<196xf32> to vector<196x1xf32>
    %cst_1 = arith.constant 0.001953125 : f32
    %10 = vector.broadcast %cst_1 : f32 to vector<196x1xf32>
    %11 = arith.mulf %9, %10 : vector<196x1xf32>
    %12 = vector.broadcast %11 : vector<196x1xf32> to vector<196x512xf32>
    %13 = arith.subf %0, %12 : vector<196x512xf32>
    %14 = arith.mulf %13, %13 : vector<196x512xf32>
    %15 = vector.extract_strided_slice %14 {offsets = [0, 0], sizes = [196, 128], strides = [1, 1]} : vector<196x512xf32> to vector<196x128xf32>
    %16 = vector.extract_strided_slice %14 {offsets = [0, 128], sizes = [196, 128], strides = [1, 1]} : vector<196x512xf32> to vector<196x128xf32>
    %17 = arith.addf %15, %16 : vector<196x128xf32>
    %18 = vector.extract_strided_slice %14 {offsets = [0, 256], sizes = [196, 128], strides = [1, 1]} : vector<196x512xf32> to vector<196x128xf32>
    %19 = arith.addf %17, %18 : vector<196x128xf32>
    %20 = vector.extract_strided_slice %14 {offsets = [0, 384], sizes = [196, 128], strides = [1, 1]} : vector<196x512xf32> to vector<196x128xf32>
    %21 = arith.addf %19, %20 : vector<196x128xf32>
    %cst_2 = arith.constant dense<0.000000e+00> : vector<196xf32>
    %22 = vector.multi_reduction <add>, %21, %cst_2 [1] : vector<196x128xf32> to vector<196xf32>
    %23 = vector.shape_cast %22 : vector<196xf32> to vector<196x1xf32>
    %cst_3 = arith.constant 0.001953125 : f32
    %24 = vector.broadcast %cst_3 : f32 to vector<196x1xf32>
    %25 = arith.mulf %23, %24 : vector<196x1xf32>
    %cst_4 = arith.constant 9.99999974E-6 : f32
    %26 = vector.broadcast %cst_4 : f32 to vector<196x1xf32>
    %27 = arith.addf %25, %26 : vector<196x1xf32>
    %28 = math.rsqrt %27 : vector<196x1xf32>
    %29 = vector.broadcast %28 : vector<196x1xf32> to vector<196x512xf32>
    %30 = arith.mulf %13, %29 : vector<196x512xf32>
    %c0_5 = arith.constant 0 : index
    %c0_6 = arith.constant 0 : index
    %31 = vector.load %arg1[%c0_5, %c0_6] : memref<1x512xf32, #tpu.memory_space<vmem>>, vector<1x512xf32>
    %32 = vector.broadcast %31 : vector<1x512xf32> to vector<196x512xf32>
    %33 = arith.mulf %30, %32 : vector<196x512xf32>
    %c0_7 = arith.constant 0 : index
    %c0_8 = arith.constant 0 : index
    %34 = vector.load %arg2[%c0_7, %c0_8] : memref<1x512xf32, #tpu.memory_space<vmem>>, vector<1x512xf32>
    %35 = vector.broadcast %34 : vector<1x512xf32> to vector<196x512xf32>
    %36 = arith.addf %33, %35 : vector<196x512xf32>
    %c0_9 = arith.constant 0 : index
    %c0_10 = arith.constant 0 : index
    %37 = vector.load %arg3[%c0_9, %c0_10] : memref<196x512xf32, #tpu.memory_space<vmem>>, vector<196x512xf32>
    tpu.vector_store %arg3[%c0_9, %c0_10], %36 {strides = array<i32>} : memref<196x512xf32, #tpu.memory_space<vmem>>, vector<196x512xf32>,
    return
  }
}

</mosaic_0001>

<llo_original>
// kernel: tpu_custom_call.1
$region0: #{tpu_custom_call.1}
  #allocation0 [shape = 'u32[]', space=smem, size = 0x4, offset = 0x4, fixed_abs, tag = 'smem constant byte address 0x4 - core index']
  #allocation1 [shape = 'u32[144,128]{1,0:T(1,128)}', space=vmem, size = 0x12000, scoped, tag = 'internal scratch']
  %s0 = inlined_call_operand.hbm [shape: f32[196,512], index: 0, kind: input, shape index: {}]
  %s1 = inlined_call_operand.hbm [shape: f32[1,512], index: 1, kind: input, shape index: {}]
  %s2 = inlined_call_operand.vmem [shape: f32[1,512], index: 2, kind: input, shape index: {}]
  %s3 = inlined_call_operand.hbm [shape: f32[196,512], index: 3, kind: output, shape index: {}]
  %s4 = sld [smem:[#allocation0]]
  $region30: #{tpu_custom_call.1} parent=0
    _
  %s6 = ssub.s32 1, %s4
  %s7 = scalar_select 0, %s6, %s4
  $region1: #{tpu_custom_call.1} parent=0
    #allocation2 [shape = 'u8[409600]{0}', space=vmem, size = 0x64000, scoped, tag = 'input window, operand 0, single buffered']
    #allocation3 [shape = 's32[1]{0}', space=sflag, size = 0x4, scoped, tag = 'scoped memory for tpu_custom_call.1']
    #allocation4 [shape = 's32[1]{0}', space=sflag, size = 0x4, scoped, tag = 'scoped memory for tpu_custom_call.1']
    #allocation5 [shape = 'u8[2048]{0}', space=vmem, size = 0x800, scoped, tag = 'input window, operand 1, single buffered']
    #allocation6 [shape = 's32[1]{0}', space=sflag, size = 0x4, scoped, tag = 'scoped memory for tpu_custom_call.1']
    #allocation7 [shape = 'u8[409600]{0}', space=vmem, size = 0x64000, scoped, tag = 'output window, operand 0, single buffered']
    %8 = vsyncpa [#allocation3], 0
    %9 = vsyncpa [#allocation6], 0
    %10 = vsyncpa [#allocation4], 0
    // Predicated region
    $region2: #{tpu_custom_call.1} parent=1 // pred_check
      _
    $region3: #{tpu_custom_call.1} parent=1 // pred_check_branch
      %12 = sbr.rel (0) target = $region5
    $region4: #{tpu_custom_call.1} parent=1 // pred_region
      %s14 = ssub.s32 12800, 12800
      %15 = vsyncadd [#allocation3], %s14
      %s16 = sshll.u32 [#allocation2], 4
      %s17 = int_to_ptr.vmem [resolvable:$true] %s16
      %22 = dma.hbm_to_vmem [thread:$0]  %s0, 12800, %s17, [#allocation3], 512, 512, 32
    $region5: #{tpu_custom_call.1} parent=1 // pred_fallthru
      _
    // Predicated region
    $region6: #{tpu_custom_call.1} parent=1 // pred_check
      _
    $region7: #{tpu_custom_call.1} parent=1 // pred_check_branch
      %24 = sbr.rel (0) target = $region9
    $region8: #{tpu_custom_call.1} parent=1 // pred_region
      %s26 = ssub.s32 64, 64
      %27 = vsyncadd [#allocation6], %s26
      %s29 = sshll.u32 [#allocation5], 4
      %s30 = int_to_ptr.vmem [resolvable:$true] %s29
      %32 = dma.hbm_to_vmem [thread:$0]  %s1, 64, %s30, [#allocation6]
    $region9: #{tpu_custom_call.1} parent=1 // pred_fallthru
      _
    // Predicated region
    $region10: #{tpu_custom_call.1} parent=1 // pred_check
      _
    $region11: #{tpu_custom_call.1} parent=1 // pred_check_branch
      %34 = sbr.rel (0) target = $region13
    $region12: #{tpu_custom_call.1} parent=1 // pred_region
      _
    $region13: #{tpu_custom_call.1} parent=1 // pred_fallthru
      _
    // Predicated region
    $region14: #{tpu_custom_call.1} parent=1 // pred_check
      _
    $region15: #{tpu_custom_call.1} parent=1 // pred_check_branch
      %36 = sbr.rel (0) target = $region17
    $region16: #{tpu_custom_call.1} parent=1 // pred_region
      %37 = dma.done [#allocation3], 12800
    $region17: #{tpu_custom_call.1} parent=1 // pred_fallthru
      _
    // Predicated region
    $region18: #{tpu_custom_call.1} parent=1 // pred_check
      _
    $region19: #{tpu_custom_call.1} parent=1 // pred_check_branch
      %39 = sbr.rel (0) target = $region21
    $region20: #{tpu_custom_call.1} parent=1 // pred_region
      %40 = dma.done [#allocation6], 64
    $region21: #{tpu_custom_call.1} parent=1 // pred_fallthru
      _
    %v41 = vld [vmem:[#allocation2] sm:$0xff]
    %v42 = vld [vmem:[#allocation2 + $0x8] sm:$0xff]
    %v43 = vld [vmem:[#allocation2 + $0x10] sm:$0xff]
    %v44 = vld [vmem:[#allocation2 + $0x18] sm:$0xff]
    %v45 = vld [vmem:[#allocation2 + $0x20] sm:$0xff]
    %v46 = vld [vmem:[#allocation2 + $0x28] sm:$0xff]
    %v47 = vld [vmem:[#allocation2 + $0x30] sm:$0xff]
    %v48 = vld [vmem:[#allocation2 + $0x38] sm:$0xff]
    %v49 = vld [vmem:[#allocation2 + $0x40] sm:$0xff]
    %v50 = vld [vmem:[#allocation2 + $0x48] sm:$0xff]
    %v51 = vld [vmem:[#allocation2 + $0x50] sm:$0xff]
    %v52 = vld [vmem:[#allocation2 + $0x58] sm:$0xff]
    %v53 = vld [vmem:[#allocation2 + $0x60] sm:$0xff]
    %v54 = vld [vmem:[#allocation2 + $0x68] sm:$0xff]
    %v55 = vld [vmem:[#allocation2 + $0x70] sm:$0xff]
    %v56 = vld [vmem:[#allocation2 + $0x78] sm:$0xff]
    %v57 = vld [vmem:[#allocation2 + $0x80] sm:$0xff]
    %v58 = vld [vmem:[#allocation2 + $0x88] sm:$0xff]
    %v59 = vld [vmem:[#allocation2 + $0x90] sm:$0xff]
    %v60 = vld [vmem:[#allocation2 + $0x98] sm:$0xff]
    %v61 = vld [vmem:[#allocation2 + $0xa0] sm:$0xff]
    %v62 = vld [vmem:[#allocation2 + $0xa8] sm:$0xff]
    %v63 = vld [vmem:[#allocation2 + $0xb0] sm:$0xff]
    %v64 = vld [vmem:[#allocation2 + $0xb8] sm:$0xff]
    %v65 = vld [vmem:[#allocation2 + $0xc0] sm:$0xff]
    %v66 = vld [vmem:[#allocation2 + $0xc8] sm:$0xff]
    %v67 = vld [vmem:[#allocation2 + $0xd0] sm:$0xff]
    %v68 = vld [vmem:[#allocation2 + $0xd8] sm:$0xff]
    %v69 = vld [vmem:[#allocation2 + $0xe0] sm:$0xff]
    %v70 = vld [vmem:[#allocation2 + $0xe8] sm:$0xff]
    %v71 = vld [vmem:[#allocation2 + $0xf0] sm:$0xff]
    %v72 = vld [vmem:[#allocation2 + $0xf8] sm:$0xff]
    %v73 = vld [vmem:[#allocation2 + $0x100] sm:$0xff]
    %v74 = vld [vmem:[#allocation2 + $0x108] sm:$0xff]
    %v75 = vld [vmem:[#allocation2 + $0x110] sm:$0xff]
    %v76 = vld [vmem:[#allocation2 + $0x118] sm:$0xff]
    %v77 = vld [vmem:[#allocation2 + $0x120] sm:$0xff]
    %v78 = vld [vmem:[#allocation2 + $0x128] sm:$0xff]
    %v79 = vld [vmem:[#allocation2 + $0x130] sm:$0xff]
    %v80 = vld [vmem:[#allocation2 + $0x138] sm:$0xff]
    %v81 = vld [vmem:[#allocation2 + $0x140] sm:$0xff]
    %v82 = vld [vmem:[#allocation2 + $0x148] sm:$0xff]
    %v83 = vld [vmem:[#allocation2 + $0x150] sm:$0xff]
    %v84 = vld [vmem:[#allocation2 + $0x158] sm:$0xff]
    %v85 = vld [vmem:[#allocation2 + $0x160] sm:$0xff]
    %v86 = vld [vmem:[#allocation2 + $0x168] sm:$0xff]
    %v87 = vld [vmem:[#allocation2 + $0x170] sm:$0xff]
    %v88 = vld [vmem:[#allocation2 + $0x178] sm:$0xff]
    %v89 = vld [vmem:[#allocation2 + $0x180] sm:$0xff]
    %v90 = vld [vmem:[#allocation2 + $0x188] sm:$0xff]
    %v91 = vld [vmem:[#allocation2 + $0x190] sm:$0xff]
    %v92 = vld [vmem:[#allocation2 + $0x198] sm:$0xff]
    %v93 = vld [vmem:[#allocation2 + $0x1a0] sm:$0xff]
    %v94 = vld [vmem:[#allocation2 + $0x1a8] sm:$0xff]
    %v95 = vld [vmem:[#allocation2 + $0x1b0] sm:$0xff]
    %v96 = vld [vmem:[#allocation2 + $0x1b8] sm:$0xff]
    %v97 = vld [vmem:[#allocation2 + $0x1c0] sm:$0xff]
    %v98 = vld [vmem:[#allocation2 + $0x1c8] sm:$0xff]
    %v99 = vld [vmem:[#allocation2 + $0x1d0] sm:$0xff]
    %v100 = vld [vmem:[#allocation2 + $0x1d8] sm:$0xff]
    %v101 = vld [vmem:[#allocation2 + $0x1e0] sm:$0xff]
    %v102 = vld [vmem:[#allocation2 + $0x1e8] sm:$0xff]
    %v103 = vld [vmem:[#allocation2 + $0x1f0] sm:$0xff]
    %v104 = vld [vmem:[#allocation2 + $0x1f8] sm:$0xff]
    %v105 = vld [vmem:[#allocation2 + $0x200] sm:$0xff]
    %v106 = vld [vmem:[#allocation2 + $0x208] sm:$0xff]
    %v107 = vld [vmem:[#allocation2 + $0x210] sm:$0xff]
    %v108 = vld [vmem:[#allocation2 + $0x218] sm:$0xff]
    %v109 = vld [vmem:[#allocation2 + $0x220] sm:$0xff]
    %v110 = vld [vmem:[#allocation2 + $0x228] sm:$0xff]
    %v111 = vld [vmem:[#allocation2 + $0x230] sm:$0xff]
    %v112 = vld [vmem:[#allocation2 + $0x238] sm:$0xff]
    %v113 = vld [vmem:[#allocation2 + $0x240] sm:$0xff]
    %v114 = vld [vmem:[#allocation2 + $0x248] sm:$0xff]
    %v115 = vld [vmem:[#allocation2 + $0x250] sm:$0xff]
    %v116 = vld [vmem:[#allocation2 + $0x258] sm:$0xff]
    %v117 = vld [vmem:[#allocation2 + $0x260] sm:$0xff]
    %v118 = vld [vmem:[#allocation2 + $0x268] sm:$0xff]
    %v119 = vld [vmem:[#allocation2 + $0x270] sm:$0xff]
    %v120 = vld [vmem:[#allocation2 + $0x278] sm:$0xff]
    %v121 = vld [vmem:[#allocation2 + $0x280] sm:$0xff]
    %v122 = vld [vmem:[#allocation2 + $0x288] sm:$0xff]
    %v123 = vld [vmem:[#allocation2 + $0x290] sm:$0xff]
    %v124 = vld [vmem:[#allocation2 + $0x298] sm:$0xff]
    %v125 = vld [vmem:[#allocation2 + $0x2a0] sm:$0xff]
    %v126 = vld [vmem:[#allocation2 + $0x2a8] sm:$0xff]
    %v127 = vld [vmem:[#allocation2 + $0x2b0] sm:$0xff]
    %v128 = vld [vmem:[#allocation2 + $0x2b8] sm:$0xff]
    %v129 = vld [vmem:[#allocation2 + $0x2c0] sm:$0xff]
    %v130 = vld [vmem:[#allocation2 + $0x2c8] sm:$0xff]
    %v131 = vld [vmem:[#allocation2 + $0x2d0] sm:$0xff]
    %v132 = vld [vmem:[#allocation2 + $0x2d8] sm:$0xff]
    %v133 = vld [vmem:[#allocation2 + $0x2e0] sm:$0xff]
    %v134 = vld [vmem:[#allocation2 + $0x2e8] sm:$0xff]
    %v135 = vld [vmem:[#allocation2 + $0x2f0] sm:$0xff]
    %v136 = vld [vmem:[#allocation2 + $0x2f8] sm:$0xff]
    %v137 = vld [vmem:[#allocation2 + $0x300] sm:$0xf]
    %v138 = vld [vmem:[#allocation2 + $0x308] sm:$0xf]
    %v139 = vld [vmem:[#allocation2 + $0x310] sm:$0xf]
    %v140 = vld [vmem:[#allocation2 + $0x318] sm:$0xf]
    %v141 = vadd.f32 %v41, %v42
    %v142 = vadd.f32 %v45, %v46
    %v143 = vadd.f32 %v49, %v50
    %v144 = vadd.f32 %v53, %v54
    %v145 = vadd.f32 %v57, %v58
    %v146 = vadd.f32 %v61, %v62
    %v147 = vadd.f32 %v65, %v66
    %v148 = vadd.f32 %v69, %v70
    %v149 = vadd.f32 %v73, %v74
    %v150 = vadd.f32 %v77, %v78
    %v151 = vadd.f32 %v81, %v82
    %v152 = vadd.f32 %v85, %v86
    %v153 = vadd.f32 %v89, %v90
    %v154 = vadd.f32 %v93, %v94
    %v155 = vadd.f32 %v97, %v98
    %v156 = vadd.f32 %v101, %v102
    %v157 = vadd.f32 %v105, %v106
    %v158 = vadd.f32 %v109, %v110
    %v159 = vadd.f32 %v113, %v114
    %v160 = vadd.f32 %v117, %v118
    %v161 = vadd.f32 %v121, %v122
    %v162 = vadd.f32 %v125, %v126
    %v163 = vadd.f32 %v129, %v130
    %v164 = vadd.f32 %v133, %v134
    %v165 = vadd.f32 %v137, %v138
    %v166 = vadd.f32 %v141, %v43
    %v167 = vadd.f32 %v142, %v47
    %v168 = vadd.f32 %v143, %v51
    %v169 = vadd.f32 %v144, %v55
    %v170 = vadd.f32 %v145, %v59
    %v171 = vadd.f32 %v146, %v63
    %v172 = vadd.f32 %v147, %v67
    %v173 = vadd.f32 %v148, %v71
    %v174 = vadd.f32 %v149, %v75
    %v175 = vadd.f32 %v150, %v79
    %v176 = vadd.f32 %v151, %v83
    %v177 = vadd.f32 %v152, %v87
    %v178 = vadd.f32 %v153, %v91
    %v179 = vadd.f32 %v154, %v95
    %v180 = vadd.f32 %v155, %v99
    %v181 = vadd.f32 %v156, %v103
    %v182 = vadd.f32 %v157, %v107
    %v183 = vadd.f32 %v158, %v111
    %v184 = vadd.f32 %v159, %v115
    %v185 = vadd.f32 %v160, %v119
    %v186 = vadd.f32 %v161, %v123
    %v187 = vadd.f32 %v162, %v127
    %v188 = vadd.f32 %v163, %v131
    %v189 = vadd.f32 %v164, %v135
    %v190 = vadd.f32 %v165, %v139
    %v191 = vadd.f32 %v166, %v44
    %v192 = vadd.f32 %v167, %v48
    %v193 = vadd.f32 %v168, %v52
    %v194 = vadd.f32 %v169, %v56
    %v195 = vadd.f32 %v170, %v60
    %v196 = vadd.f32 %v171, %v64
    %v197 = vadd.f32 %v172, %v68
    %v198 = vadd.f32 %v173, %v72
    %v199 = vadd.f32 %v174, %v76
    %v200 = vadd.f32 %v175, %v80
    %v201 = vadd.f32 %v176, %v84
    %v202 = vadd.f32 %v177, %v88
    %v203 = vadd.f32 %v178, %v92
    %v204 = vadd.f32 %v179, %v96
    %v205 = vadd.f32 %v180, %v100
    %v206 = vadd.f32 %v181, %v104
    %v207 = vadd.f32 %v182, %v108
    %v208 = vadd.f32 %v183, %v112
    %v209 = vadd.f32 %v184, %v116
    %v210 = vadd.f32 %v185, %v120
    %v211 = vadd.f32 %v186, %v124
    %v212 = vadd.f32 %v187, %v128
    %v213 = vadd.f32 %v188, %v132
    %v214 = vadd.f32 %v189, %v136
    %v215 = vadd.f32 %v190, %v140
    %216 = vadd.xlane.f32.xlu0 %v191
    %v217 = vpop.xlane.xlu0 %216
    %218 = vadd.xlane.f32.xlu0 %v192
    %v219 = vpop.xlane.xlu0 %218
    %220 = vadd.xlane.f32.xlu0 %v193
    %v221 = vpop.xlane.xlu0 %220
    %222 = vadd.xlane.f32.xlu0 %v194
    %v223 = vpop.xlane.xlu0 %222
    %224 = vadd.xlane.f32.xlu0 %v195
    %v225 = vpop.xlane.xlu0 %224
    %226 = vadd.xlane.f32.xlu0 %v196
    %v227 = vpop.xlane.xlu0 %226
    %228 = vadd.xlane.f32.xlu0 %v197
    %v229 = vpop.xlane.xlu0 %228
    %230 = vadd.xlane.f32.xlu0 %v198
    %v231 = vpop.xlane.xlu0 %230
    %232 = vadd.xlane.f32.xlu0 %v199
    %v233 = vpop.xlane.xlu0 %232
    %234 = vadd.xlane.f32.xlu0 %v200
    %v235 = vpop.xlane.xlu0 %234
    %236 = vadd.xlane.f32.xlu0 %v201
    %v237 = vpop.xlane.xlu0 %236
    %238 = vadd.xlane.f32.xlu0 %v202
    %v239 = vpop.xlane.xlu0 %238
    %240 = vadd.xlane.f32.xlu0 %v203
    %v241 = vpop.xlane.xlu0 %240
    %242 = vadd.xlane.f32.xlu0 %v204
    %v243 = vpop.xlane.xlu0 %242
    %244 = vadd.xlane.f32.xlu0 %v205
    %v245 = vpop.xlane.xlu0 %244
    %246 = vadd.xlane.f32.xlu0 %v206
    %v247 = vpop.xlane.xlu0 %246
    %248 = vadd.xlane.f32.xlu0 %v207
    %v249 = vpop.xlane.xlu0 %248
    %250 = vadd.xlane.f32.xlu0 %v208
    %v251 = vpop.xlane.xlu0 %250
    %252 = vadd.xlane.f32.xlu0 %v209
    %v253 = vpop.xlane.xlu0 %252
    %254 = vadd.xlane.f32.xlu0 %v210
    %v255 = vpop.xlane.xlu0 %254
    %256 = vadd.xlane.f32.xlu0 %v211
    %v257 = vpop.xlane.xlu0 %256
    %258 = vadd.xlane.f32.xlu0 %v212
    %v259 = vpop.xlane.xlu0 %258
    %260 = vadd.xlane.f32.xlu0 %v213
    %v261 = vpop.xlane.xlu0 %260
    %262 = vadd.xlane.f32.xlu0 %v214
    %v263 = vpop.xlane.xlu0 %262
    %vm264 = vcmask 1043456
    %v265 = vsel %vm264, %v215, 0.0
    %266 = vadd.xlane.f32.xlu0 %v265
    %v267 = vpop.xlane.xlu0 %266
    %v268 = vmul.f32 %v217, 0.001953125
    %v269 = vmul.f32 %v219, 0.001953125
    %v270 = vmul.f32 %v221, 0.001953125
    %v271 = vmul.f32 %v223, 0.001953125
    %v272 = vmul.f32 %v225, 0.001953125
    %v273 = vmul.f32 %v227, 0.001953125
    %v274 = vmul.f32 %v229, 0.001953125
    %v275 = vmul.f32 %v231, 0.001953125
    %v276 = vmul.f32 %v233, 0.001953125
    %v277 = vmul.f32 %v235, 0.001953125
    %v278 = vmul.f32 %v237, 0.001953125
    %v279 = vmul.f32 %v239, 0.001953125
    %v280 = vmul.f32 %v241, 0.001953125
    %v281 = vmul.f32 %v243, 0.001953125
    %v282 = vmul.f32 %v245, 0.001953125
    %v283 = vmul.f32 %v247, 0.001953125
    %v284 = vmul.f32 %v249, 0.001953125
    %v285 = vmul.f32 %v251, 0.001953125
    %v286 = vmul.f32 %v253, 0.001953125
    %v287 = vmul.f32 %v255, 0.001953125
    %v288 = vmul.f32 %v257, 0.001953125
    %v289 = vmul.f32 %v259, 0.001953125
    %v290 = vmul.f32 %v261, 0.001953125
    %v291 = vmul.f32 %v263, 0.001953125
    %v292 = vmul.f32 %v267, 0.001953125
    %v293 = vsub.f32 %v41, %v268
    %v294 = vsub.f32 %v42, %v268
    %v295 = vsub.f32 %v43, %v268
    %v296 = vsub.f32 %v44, %v268
    %v297 = vsub.f32 %v45, %v269
    %v298 = vsub.f32 %v46, %v269
    %v299 = vsub.f32 %v47, %v269
    %v300 = vsub.f32 %v48, %v269
    %v301 = vsub.f32 %v49, %v270
    %v302 = vsub.f32 %v50, %v270
    %v303 = vsub.f32 %v51, %v270
    %v304 = vsub.f32 %v52, %v270
    %v305 = vsub.f32 %v53, %v271
    %v306 = vsub.f32 %v54, %v271
    %v307 = vsub.f32 %v55, %v271
    %v308 = vsub.f32 %v56, %v271
    %v309 = vsub.f32 %v57, %v272
    %v310 = vsub.f32 %v58, %v272
    %v311 = vsub.f32 %v59, %v272
    %v312 = vsub.f32 %v60, %v272
    %v313 = vsub.f32 %v61, %v273
    %v314 = vsub.f32 %v62, %v273
    %v315 = vsub.f32 %v63, %v273
    %v316 = vsub.f32 %v64, %v273
    %v317 = vsub.f32 %v65, %v274
    %v318 = vsub.f32 %v66, %v274
    %v319 = vsub.f32 %v67, %v274
    %v320 = vsub.f32 %v68, %v274
    %v321 = vsub.f32 %v69, %v275
    %v322 = vsub.f32 %v70, %v275
    %v323 = vsub.f32 %v71, %v275
    %v324 = vsub.f32 %v72, %v275
    %v325 = vsub.f32 %v73, %v276
    %v326 = vsub.f32 %v74, %v276
    %v327 = vsub.f32 %v75, %v276
    %v328 = vsub.f32 %v76, %v276
    %v329 = vsub.f32 %v77, %v277
    %v330 = vsub.f32 %v78, %v277
    %v331 = vsub.f32 %v79, %v277
    %v332 = vsub.f32 %v80, %v277
    %v333 = vsub.f32 %v81, %v278
    %v334 = vsub.f32 %v82, %v278
    %v335 = vsub.f32 %v83, %v278
    %v336 = vsub.f32 %v84, %v278
    %v337 = vsub.f32 %v85, %v279
    %v338 = vsub.f32 %v86, %v279
    %v339 = vsub.f32 %v87, %v279
    %v340 = vsub.f32 %v88, %v279
    %v341 = vsub.f32 %v89, %v280
    %v342 = vsub.f32 %v90, %v280
    %v343 = vsub.f32 %v91, %v280
    %v344 = vsub.f32 %v92, %v280
    %v345 = vsub.f32 %v93, %v281
    %v346 = vsub.f32 %v94, %v281
    %v347 = vsub.f32 %v95, %v281
    %v348 = vsub.f32 %v96, %v281
    %v349 = vsub.f32 %v97, %v282
    %v350 = vsub.f32 %v98, %v282
    %v351 = vsub.f32 %v99, %v282
    %v352 = vsub.f32 %v100, %v282
    %v353 = vsub.f32 %v101, %v283
    %v354 = vsub.f32 %v102, %v283
    %v355 = vsub.f32 %v103, %v283
    %v356 = vsub.f32 %v104, %v283
    %v357 = vsub.f32 %v105, %v284
    %v358 = vsub.f32 %v106, %v284
    %v359 = vsub.f32 %v107, %v284
    %v360 = vsub.f32 %v108, %v284
    %v361 = vsub.f32 %v109, %v285
    %v362 = vsub.f32 %v110, %v285
    %v363 = vsub.f32 %v111, %v285
    %v364 = vsub.f32 %v112, %v285
    %v365 = vsub.f32 %v113, %v286
    %v366 = vsub.f32 %v114, %v286
    %v367 = vsub.f32 %v115, %v286
    %v368 = vsub.f32 %v116, %v286
    %v369 = vsub.f32 %v117, %v287
    %v370 = vsub.f32 %v118, %v287
    %v371 = vsub.f32 %v119, %v287
    %v372 = vsub.f32 %v120, %v287
    %v373 = vsub.f32 %v121, %v288
    %v374 = vsub.f32 %v122, %v288
    %v375 = vsub.f32 %v123, %v288
    %v376 = vsub.f32 %v124, %v288
    %v377 = vsub.f32 %v125, %v289
    %v378 = vsub.f32 %v126, %v289
    %v379 = vsub.f32 %v127, %v289
    %v380 = vsub.f32 %v128, %v289
    %v381 = vsub.f32 %v129, %v290
    %v382 = vsub.f32 %v130, %v290
    %v383 = vsub.f32 %v131, %v290
    %v384 = vsub.f32 %v132, %v290
    %v385 = vsub.f32 %v133, %v291
    %v386 = vsub.f32 %v134, %v291
    %v387 = vsub.f32 %v135, %v291
    %v388 = vsub.f32 %v136, %v291
    %v389 = vsub.f32 %v137, %v292
    %v390 = vsub.f32 %v138, %v292
    %v391 = vsub.f32 %v139, %v292
    %v392 = vsub.f32 %v140, %v292
    %v393 = vmul.f32 %v293, %v293
    %v394 = vmul.f32 %v294, %v294
    %v395 = vmul.f32 %v295, %v295
    %v396 = vmul.f32 %v296, %v296
    %v397 = vmul.f32 %v297, %v297
    %v398 = vmul.f32 %v298, %v298
    %v399 = vmul.f32 %v299, %v299
    %v400 = vmul.f32 %v300, %v300
    %v401 = vmul.f32 %v301, %v301
    %v402 = vmul.f32 %v302, %v302
    %v403 = vmul.f32 %v303, %v303
    %v404 = vmul.f32 %v304, %v304
    %v405 = vmul.f32 %v305, %v305
    %v406 = vmul.f32 %v306, %v306
    %v407 = vmul.f32 %v307, %v307
    %v408 = vmul.f32 %v308, %v308
    %v409 = vmul.f32 %v309, %v309
    %v410 = vmul.f32 %v310, %v310
    %v411 = vmul.f32 %v311, %v311
    %v412 = vmul.f32 %v312, %v312
    %v413 = vmul.f32 %v313, %v313
    %v414 = vmul.f32 %v314, %v314
    %v415 = vmul.f32 %v315, %v315
    %v416 = vmul.f32 %v316, %v316
    %v417 = vmul.f32 %v317, %v317
    %v418 = vmul.f32 %v318, %v318
    %v419 = vmul.f32 %v319, %v319
    %v420 = vmul.f32 %v320, %v320
    %v421 = vmul.f32 %v321, %v321
    %v422 = vmul.f32 %v322, %v322
    %v423 = vmul.f32 %v323, %v323
    %v424 = vmul.f32 %v324, %v324
    %v425 = vmul.f32 %v325, %v325
    %v426 = vmul.f32 %v326, %v326
    %v427 = vmul.f32 %v327, %v327
    %v428 = vmul.f32 %v328, %v328
    %v429 = vmul.f32 %v329, %v329
    %v430 = vmul.f32 %v330, %v330
    %v431 = vmul.f32 %v331, %v331
    %v432 = vmul.f32 %v332, %v332
    %v433 = vmul.f32 %v333, %v333
    %v434 = vmul.f32 %v334, %v334
    %v435 = vmul.f32 %v335, %v335
    %v436 = vmul.f32 %v336, %v336
    %v437 = vmul.f32 %v337, %v337
    %v438 = vmul.f32 %v338, %v338
    %v439 = vmul.f32 %v339, %v339
    %v440 = vmul.f32 %v340, %v340
    %v441 = vmul.f32 %v341, %v341
    %v442 = vmul.f32 %v342, %v342
    %v443 = vmul.f32 %v343, %v343
    %v444 = vmul.f32 %v344, %v344
    %v445 = vmul.f32 %v345, %v345
    %v446 = vmul.f32 %v346, %v346
    %v447 = vmul.f32 %v347, %v347
    %v448 = vmul.f32 %v348, %v348
    %v449 = vmul.f32 %v349, %v349
    %v450 = vmul.f32 %v350, %v350
    %v451 = vmul.f32 %v351, %v351
    %v452 = vmul.f32 %v352, %v352
    %v453 = vmul.f32 %v353, %v353
    %v454 = vmul.f32 %v354, %v354
    %v455 = vmul.f32 %v355, %v355
    %v456 = vmul.f32 %v356, %v356
    %v457 = vmul.f32 %v357, %v357
    %v458 = vmul.f32 %v358, %v358
    %v459 = vmul.f32 %v359, %v359
    %v460 = vmul.f32 %v360, %v360
    %v461 = vmul.f32 %v361, %v361
    %v462 = vmul.f32 %v362, %v362
    %v463 = vmul.f32 %v363, %v363
    %v464 = vmul.f32 %v364, %v364
    %v465 = vmul.f32 %v365, %v365
    %v466 = vmul.f32 %v366, %v366
    %v467 = vmul.f32 %v367, %v367
    %v468 = vmul.f32 %v368, %v368
    %v469 = vmul.f32 %v369, %v369
    %v470 = vmul.f32 %v370, %v370
    %v471 = vmul.f32 %v371, %v371
    %v472 = vmul.f32 %v372, %v372
    %v473 = vmul.f32 %v373, %v373
    %v474 = vmul.f32 %v374, %v374
    %v475 = vmul.f32 %v375, %v375
    %v476 = vmul.f32 %v376, %v376
    %v477 = vmul.f32 %v377, %v377
    %v478 = vmul.f32 %v378, %v378
    %v479 = vmul.f32 %v379, %v379
    %v480 = vmul.f32 %v380, %v380
    %v481 = vmul.f32 %v381, %v381
    %v482 = vmul.f32 %v382, %v382
    %v483 = vmul.f32 %v383, %v383
    %v484 = vmul.f32 %v384, %v384
    %v485 = vmul.f32 %v385, %v385
    %v486 = vmul.f32 %v386, %v386
    %v487 = vmul.f32 %v387, %v387
    %v488 = vmul.f32 %v388, %v388
    %v489 = vmul.f32 %v389, %v389
    %v490 = vmul.f32 %v390, %v390
    %v491 = vmul.f32 %v391, %v391
    %v492 = vmul.f32 %v392, %v392
    %v493 = vadd.f32 %v393, %v394
    %v494 = vadd.f32 %v397, %v398
    %v495 = vadd.f32 %v401, %v402
    %v496 = vadd.f32 %v405, %v406
    %v497 = vadd.f32 %v409, %v410
    %v498 = vadd.f32 %v413, %v414
    %v499 = vadd.f32 %v417, %v418
    %v500 = vadd.f32 %v421, %v422
    %v501 = vadd.f32 %v425, %v426
    %v502 = vadd.f32 %v429, %v430
    %v503 = vadd.f32 %v433, %v434
    %v504 = vadd.f32 %v437, %v438
    %v505 = vadd.f32 %v441, %v442
    %v506 = vadd.f32 %v445, %v446
    %v507 = vadd.f32 %v449, %v450
    %v508 = vadd.f32 %v453, %v454
    %v509 = vadd.f32 %v457, %v458
    %v510 = vadd.f32 %v461, %v462
    %v511 = vadd.f32 %v465, %v466
    %v512 = vadd.f32 %v469, %v470
    %v513 = vadd.f32 %v473, %v474
    %v514 = vadd.f32 %v477, %v478
    %v515 = vadd.f32 %v481, %v482
    %v516 = vadd.f32 %v485, %v486
    %v517 = vadd.f32 %v489, %v490
    %v518 = vadd.f32 %v493, %v395
    %v519 = vadd.f32 %v494, %v399
    %v520 = vadd.f32 %v495, %v403
    %v521 = vadd.f32 %v496, %v407
    %v522 = vadd.f32 %v497, %v411
    %v523 = vadd.f32 %v498, %v415
    %v524 = vadd.f32 %v499, %v419
    %v525 = vadd.f32 %v500, %v423
    %v526 = vadd.f32 %v501, %v427
    %v527 = vadd.f32 %v502, %v431
    %v528 = vadd.f32 %v503, %v435
    %v529 = vadd.f32 %v504, %v439
    %v530 = vadd.f32 %v505, %v443
    %v531 = vadd.f32 %v506, %v447
    %v532 = vadd.f32 %v507, %v451
    %v533 = vadd.f32 %v508, %v455
    %v534 = vadd.f32 %v509, %v459
    %v535 = vadd.f32 %v510, %v463
    %v536 = vadd.f32 %v511, %v467
    %v537 = vadd.f32 %v512, %v471
    %v538 = vadd.f32 %v513, %v475
    %v539 = vadd.f32 %v514, %v479
    %v540 = vadd.f32 %v515, %v483
    %v541 = vadd.f32 %v516, %v487
    %v542 = vadd.f32 %v517, %v491
    %v543 = vadd.f32 %v518, %v396
    %v544 = vadd.f32 %v519, %v400
    %v545 = vadd.f32 %v520, %v404
    %v546 = vadd.f32 %v521, %v408
    %v547 = vadd.f32 %v522, %v412
    %v548 = vadd.f32 %v523, %v416
    %v549 = vadd.f32 %v524, %v420
    %v550 = vadd.f32 %v525, %v424
    %v551 = vadd.f32 %v526, %v428
    %v552 = vadd.f32 %v527, %v432
    %v553 = vadd.f32 %v528, %v436
    %v554 = vadd.f32 %v529, %v440
    %v555 = vadd.f32 %v530, %v444
    %v556 = vadd.f32 %v531, %v448
    %v557 = vadd.f32 %v532, %v452
    %v558 = vadd.f32 %v533, %v456
    %v559 = vadd.f32 %v534, %v460
    %v560 = vadd.f32 %v535, %v464
    %v561 = vadd.f32 %v536, %v468
    %v562 = vadd.f32 %v537, %v472
    %v563 = vadd.f32 %v538, %v476
    %v564 = vadd.f32 %v539, %v480
    %v565 = vadd.f32 %v540, %v484
    %v566 = vadd.f32 %v541, %v488
    %v567 = vadd.f32 %v542, %v492
    %568 = vadd.xlane.f32.xlu0 %v543
    %v569 = vpop.xlane.xlu0 %568
    %570 = vadd.xlane.f32.xlu0 %v544
    %v571 = vpop.xlane.xlu0 %570
    %572 = vadd.xlane.f32.xlu0 %v545
    %v573 = vpop.xlane.xlu0 %572
    %574 = vadd.xlane.f32.xlu0 %v546
    %v575 = vpop.xlane.xlu0 %574
    %576 = vadd.xlane.f32.xlu0 %v547
    %v577 = vpop.xlane.xlu0 %576
    %578 = vadd.xlane.f32.xlu0 %v548
    %v579 = vpop.xlane.xlu0 %578
    %580 = vadd.xlane.f32.xlu0 %v549
    %v581 = vpop.xlane.xlu0 %580
    %582 = vadd.xlane.f32.xlu0 %v550
    %v583 = vpop.xlane.xlu0 %582
    %584 = vadd.xlane.f32.xlu0 %v551
    %v585 = vpop.xlane.xlu0 %584
    %586 = vadd.xlane.f32.xlu0 %v552
    %v587 = vpop.xlane.xlu0 %586
    %588 = vadd.xlane.f32.xlu0 %v553
    %v589 = vpop.xlane.xlu0 %588
    %590 = vadd.xlane.f32.xlu0 %v554
    %v591 = vpop.xlane.xlu0 %590
    %592 = vadd.xlane.f32.xlu0 %v555
    %v593 = vpop.xlane.xlu0 %592
    %594 = vadd.xlane.f32.xlu0 %v556
    %v595 = vpop.xlane.xlu0 %594
    %596 = vadd.xlane.f32.xlu0 %v557
    %v597 = vpop.xlane.xlu0 %596
    %598 = vadd.xlane.f32.xlu0 %v558
    %v599 = vpop.xlane.xlu0 %598
    %600 = vadd.xlane.f32.xlu0 %v559
    %v601 = vpop.xlane.xlu0 %600
    %602 = vadd.xlane.f32.xlu0 %v560
    %v603 = vpop.xlane.xlu0 %602
    %604 = vadd.xlane.f32.xlu0 %v561
    %v605 = vpop.xlane.xlu0 %604
    %606 = vadd.xlane.f32.xlu0 %v562
    %v607 = vpop.xlane.xlu0 %606
    %608 = vadd.xlane.f32.xlu0 %v563
    %v609 = vpop.xlane.xlu0 %608
    %610 = vadd.xlane.f32.xlu0 %v564
    %v611 = vpop.xlane.xlu0 %610
    %612 = vadd.xlane.f32.xlu0 %v565
    %v613 = vpop.xlane.xlu0 %612
    %614 = vadd.xlane.f32.xlu0 %v566
    %v615 = vpop.xlane.xlu0 %614
    %v616 = vsel %vm264, %v567, 0.0
    %617 = vadd.xlane.f32.xlu0 %v616
    %v618 = vpop.xlane.xlu0 %617
    %v619 = vmul.f32 %v569, 0.001953125
    %v620 = vmul.f32 %v571, 0.001953125
    %v621 = vmul.f32 %v573, 0.001953125
    %v622 = vmul.f32 %v575, 0.001953125
    %v623 = vmul.f32 %v577, 0.001953125
    %v624 = vmul.f32 %v579, 0.001953125
    %v625 = vmul.f32 %v581, 0.001953125
    %v626 = vmul.f32 %v583, 0.001953125
    %v627 = vmul.f32 %v585, 0.001953125
    %v628 = vmul.f32 %v587, 0.001953125
    %v629 = vmul.f32 %v589, 0.001953125
    %v630 = vmul.f32 %v591, 0.001953125
    %v631 = vmul.f32 %v593, 0.001953125
    %v632 = vmul.f32 %v595, 0.001953125
    %v633 = vmul.f32 %v597, 0.001953125
    %v634 = vmul.f32 %v599, 0.001953125
    %v635 = vmul.f32 %v601, 0.001953125
    %v636 = vmul.f32 %v603, 0.001953125
    %v637 = vmul.f32 %v605, 0.001953125
    %v638 = vmul.f32 %v607, 0.001953125
    %v639 = vmul.f32 %v609, 0.001953125
    %v640 = vmul.f32 %v611, 0.001953125
    %v641 = vmul.f32 %v613, 0.001953125
    %v642 = vmul.f32 %v615, 0.001953125
    %v643 = vmul.f32 %v618, 0.001953125
    %v644 = vadd.f32 %v619, 1e-05
    %v645 = vadd.f32 %v620, 1e-05
    %v646 = vadd.f32 %v621, 1e-05
    %v647 = vadd.f32 %v622, 1e-05
    %v648 = vadd.f32 %v623, 1e-05
    %v649 = vadd.f32 %v624, 1e-05
    %v650 = vadd.f32 %v625, 1e-05
    %v651 = vadd.f32 %v626, 1e-05
    %v652 = vadd.f32 %v627, 1e-05
    %v653 = vadd.f32 %v628, 1e-05
    %v654 = vadd.f32 %v629, 1e-05
    %v655 = vadd.f32 %v630, 1e-05
    %v656 = vadd.f32 %v631, 1e-05
    %v657 = vadd.f32 %v632, 1e-05
    %v658 = vadd.f32 %v633, 1e-05
    %v659 = vadd.f32 %v634, 1e-05
    %v660 = vadd.f32 %v635, 1e-05
    %v661 = vadd.f32 %v636, 1e-05
    %v662 = vadd.f32 %v637, 1e-05
    %v663 = vadd.f32 %v638, 1e-05
    %v664 = vadd.f32 %v639, 1e-05
    %v665 = vadd.f32 %v640, 1e-05
    %v666 = vadd.f32 %v641, 1e-05
    %v667 = vadd.f32 %v642, 1e-05
    %v668 = vadd.f32 %v643, 1e-05
    %v669 = vrsqrt.pop %v644
    %v670 = vrsqrt.pop %v645
    %v671 = vrsqrt.pop %v646
    %v672 = vrsqrt.pop %v647
    %v673 = vrsqrt.pop %v648
    %v674 = vrsqrt.pop %v649
    %v675 = vrsqrt.pop %v650
    %v676 = vrsqrt.pop %v651
    %v677 = vrsqrt.pop %v652
    %v678 = vrsqrt.pop %v653
    %v679 = vrsqrt.pop %v654
    %v680 = vrsqrt.pop %v655
    %v681 = vrsqrt.pop %v656
    %v682 = vrsqrt.pop %v657
    %v683 = vrsqrt.pop %v658
    %v684 = vrsqrt.pop %v659
    %v685 = vrsqrt.pop %v660
    %v686 = vrsqrt.pop %v661
    %v687 = vrsqrt.pop %v662
    %v688 = vrsqrt.pop %v663
    %v689 = vrsqrt.pop %v664
    %v690 = vrsqrt.pop %v665
    %v691 = vrsqrt.pop %v666
    %v692 = vrsqrt.pop %v667
    %v693 = vrsqrt.pop %v668
    %v694 = vmul.f32 %v293, %v669
    %v695 = vmul.f32 %v294, %v669
    %v696 = vmul.f32 %v295, %v669
    %v697 = vmul.f32 %v296, %v669
    %v698 = vmul.f32 %v297, %v670
    %v699 = vmul.f32 %v298, %v670
    %v700 = vmul.f32 %v299, %v670
    %v701 = vmul.f32 %v300, %v670
    %v702 = vmul.f32 %v301, %v671
    %v703 = vmul.f32 %v302, %v671
    %v704 = vmul.f32 %v303, %v671
    %v705 = vmul.f32 %v304, %v671
    %v706 = vmul.f32 %v305, %v672
    %v707 = vmul.f32 %v306, %v672
    %v708 = vmul.f32 %v307, %v672
    %v709 = vmul.f32 %v308, %v672
    %v710 = vmul.f32 %v309, %v673
    %v711 = vmul.f32 %v310, %v673
    %v712 = vmul.f32 %v311, %v673
    %v713 = vmul.f32 %v312, %v673
    %v714 = vmul.f32 %v313, %v674
    %v715 = vmul.f32 %v314, %v674
    %v716 = vmul.f32 %v315, %v674
    %v717 = vmul.f32 %v316, %v674
    %v718 = vmul.f32 %v317, %v675
    %v719 = vmul.f32 %v318, %v675
    %v720 = vmul.f32 %v319, %v675
    %v721 = vmul.f32 %v320, %v675
    %v722 = vmul.f32 %v321, %v676
    %v723 = vmul.f32 %v322, %v676
    %v724 = vmul.f32 %v323, %v676
    %v725 = vmul.f32 %v324, %v676
    %v726 = vmul.f32 %v325, %v677
    %v727 = vmul.f32 %v326, %v677
    %v728 = vmul.f32 %v327, %v677
    %v729 = vmul.f32 %v328, %v677
    %v730 = vmul.f32 %v329, %v678
    %v731 = vmul.f32 %v330, %v678
    %v732 = vmul.f32 %v331, %v678
    %v733 = vmul.f32 %v332, %v678
    %v734 = vmul.f32 %v333, %v679
    %v735 = vmul.f32 %v334, %v679
    %v736 = vmul.f32 %v335, %v679
    %v737 = vmul.f32 %v336, %v679
    %v738 = vmul.f32 %v337, %v680
    %v739 = vmul.f32 %v338, %v680
    %v740 = vmul.f32 %v339, %v680
    %v741 = vmul.f32 %v340, %v680
    %v742 = vmul.f32 %v341, %v681
    %v743 = vmul.f32 %v342, %v681
    %v744 = vmul.f32 %v343, %v681
    %v745 = vmul.f32 %v344, %v681
    %v746 = vmul.f32 %v345, %v682
    %v747 = vmul.f32 %v346, %v682
    %v748 = vmul.f32 %v347, %v682
    %v749 = vmul.f32 %v348, %v682
    %v750 = vmul.f32 %v349, %v683
    %v751 = vmul.f32 %v350, %v683
    %v752 = vmul.f32 %v351, %v683
    %v753 = vmul.f32 %v352, %v683
    %v754 = vmul.f32 %v353, %v684
    %v755 = vmul.f32 %v354, %v684
    %v756 = vmul.f32 %v355, %v684
    %v757 = vmul.f32 %v356, %v684
    %v758 = vmul.f32 %v357, %v685
    %v759 = vmul.f32 %v358, %v685
    %v760 = vmul.f32 %v359, %v685
    %v761 = vmul.f32 %v360, %v685
    %v762 = vmul.f32 %v361, %v686
    %v763 = vmul.f32 %v362, %v686
    %v764 = vmul.f32 %v363, %v686
    %v765 = vmul.f32 %v364, %v686
    %v766 = vmul.f32 %v365, %v687
    %v767 = vmul.f32 %v366, %v687
    %v768 = vmul.f32 %v367, %v687
    %v769 = vmul.f32 %v368, %v687
    %v770 = vmul.f32 %v369, %v688
    %v771 = vmul.f32 %v370, %v688
    %v772 = vmul.f32 %v371, %v688
    %v773 = vmul.f32 %v372, %v688
    %v774 = vmul.f32 %v373, %v689
    %v775 = vmul.f32 %v374, %v689
    %v776 = vmul.f32 %v375, %v689
    %v777 = vmul.f32 %v376, %v689
    %v778 = vmul.f32 %v377, %v690
    %v779 = vmul.f32 %v378, %v690
    %v780 = vmul.f32 %v379, %v690
    %v781 = vmul.f32 %v380, %v690
    %v782 = vmul.f32 %v381, %v691
    %v783 = vmul.f32 %v382, %v691
    %v784 = vmul.f32 %v383, %v691
    %v785 = vmul.f32 %v384, %v691
    %v786 = vmul.f32 %v385, %v692
    %v787 = vmul.f32 %v386, %v692
    %v788 = vmul.f32 %v387, %v692
    %v789 = vmul.f32 %v388, %v692
    %v790 = vmul.f32 %v389, %v693
    %v791 = vmul.f32 %v390, %v693
    %v792 = vmul.f32 %v391, %v693
    %v793 = vmul.f32 %v392, %v693
    %v794 = vld [vmem:[#allocation5] sm:$0xf]
    %v796 = vlaneseq
    %v797 = vshrl.u32 %v796, 7
    %v798 = vsub.s32 0, %v797
    %v799 = vrot.slane %v794, %v798
    %v800 = vlaneseq
    %v801 = vshrl.u32 %v800, 7
    %v802 = vsub.s32 1, %v801
    %v803 = vrot.slane %v794, %v802
    %v804 = vlaneseq
    %v805 = vshrl.u32 %v804, 7
    %v806 = vsub.s32 2, %v805
    %v807 = vrot.slane %v794, %v806
    %v808 = vlaneseq
    %v809 = vshrl.u32 %v808, 7
    %v810 = vsub.s32 3, %v809
    %v811 = vrot.slane %v794, %v810
    %v816 = vmul.f32 %v694, %v799
    %v817 = vmul.f32 %v695, %v803
    %v818 = vmul.f32 %v696, %v807
    %v819 = vmul.f32 %v697, %v811
    %v820 = vmul.f32 %v698, %v799
    %v821 = vmul.f32 %v699, %v803
    %v822 = vmul.f32 %v700, %v807
    %v823 = vmul.f32 %v701, %v811
    %v824 = vmul.f32 %v702, %v799
    %v825 = vmul.f32 %v703, %v803
    %v826 = vmul.f32 %v704, %v807
    %v827 = vmul.f32 %v705, %v811
    %v828 = vmul.f32 %v706, %v799
    %v829 = vmul.f32 %v707, %v803
    %v830 = vmul.f32 %v708, %v807
    %v831 = vmul.f32 %v709, %v811
    %v832 = vmul.f32 %v710, %v799
    %v833 = vmul.f32 %v711, %v803
    %v834 = vmul.f32 %v712, %v807
    %v835 = vmul.f32 %v713, %v811
    %v836 = vmul.f32 %v714, %v799
    %v837 = vmul.f32 %v715, %v803
    %v838 = vmul.f32 %v716, %v807
    %v839 = vmul.f32 %v717, %v811
    %v840 = vmul.f32 %v718, %v799
    %v841 = vmul.f32 %v719, %v803
    %v842 = vmul.f32 %v720, %v807
    %v843 = vmul.f32 %v721, %v811
    %v844 = vmul.f32 %v722, %v799
    %v845 = vmul.f32 %v723, %v803
    %v846 = vmul.f32 %v724, %v807
    %v847 = vmul.f32 %v725, %v811
    %v848 = vmul.f32 %v726, %v799
    %v849 = vmul.f32 %v727, %v803
    %v850 = vmul.f32 %v728, %v807
    %v851 = vmul.f32 %v729, %v811
    %v852 = vmul.f32 %v730, %v799
    %v853 = vmul.f32 %v731, %v803
    %v854 = vmul.f32 %v732, %v807
    %v855 = vmul.f32 %v733, %v811
    %v856 = vmul.f32 %v734, %v799
    %v857 = vmul.f32 %v735, %v803
    %v858 = vmul.f32 %v736, %v807
    %v859 = vmul.f32 %v737, %v811
    %v860 = vmul.f32 %v738, %v799
    %v861 = vmul.f32 %v739, %v803
    %v862 = vmul.f32 %v740, %v807
    %v863 = vmul.f32 %v741, %v811
    %v864 = vmul.f32 %v742, %v799
    %v865 = vmul.f32 %v743, %v803
    %v866 = vmul.f32 %v744, %v807
    %v867 = vmul.f32 %v745, %v811
    %v868 = vmul.f32 %v746, %v799
    %v869 = vmul.f32 %v747, %v803
    %v870 = vmul.f32 %v748, %v807
    %v871 = vmul.f32 %v749, %v811
    %v872 = vmul.f32 %v750, %v799
    %v873 = vmul.f32 %v751, %v803
    %v874 = vmul.f32 %v752, %v807
    %v875 = vmul.f32 %v753, %v811
    %v876 = vmul.f32 %v754, %v799
    %v877 = vmul.f32 %v755, %v803
    %v878 = vmul.f32 %v756, %v807
    %v879 = vmul.f32 %v757, %v811
    %v880 = vmul.f32 %v758, %v799
    %v881 = vmul.f32 %v759, %v803
    %v882 = vmul.f32 %v760, %v807
    %v883 = vmul.f32 %v761, %v811
    %v884 = vmul.f32 %v762, %v799
    %v885 = vmul.f32 %v763, %v803
    %v886 = vmul.f32 %v764, %v807
    %v887 = vmul.f32 %v765, %v811
    %v888 = vmul.f32 %v766, %v799
    %v889 = vmul.f32 %v767, %v803
    %v890 = vmul.f32 %v768, %v807
    %v891 = vmul.f32 %v769, %v811
    %v892 = vmul.f32 %v770, %v799
    %v893 = vmul.f32 %v771, %v803
    %v894 = vmul.f32 %v772, %v807
    %v895 = vmul.f32 %v773, %v811
    %v896 = vmul.f32 %v774, %v799
    %v897 = vmul.f32 %v775, %v803
    %v898 = vmul.f32 %v776, %v807
    %v899 = vmul.f32 %v777, %v811
    %v900 = vmul.f32 %v778, %v799
    %v901 = vmul.f32 %v779, %v803
    %v902 = vmul.f32 %v780, %v807
    %v903 = vmul.f32 %v781, %v811
    %v904 = vmul.f32 %v782, %v799
    %v905 = vmul.f32 %v783, %v803
    %v906 = vmul.f32 %v784, %v807
    %v907 = vmul.f32 %v785, %v811
    %v908 = vmul.f32 %v786, %v799
    %v909 = vmul.f32 %v787, %v803
    %v910 = vmul.f32 %v788, %v807
    %v911 = vmul.f32 %v789, %v811
    %v912 = vmul.f32 %v790, %v799
    %v913 = vmul.f32 %v791, %v803
    %v914 = vmul.f32 %v792, %v807
    %v915 = vmul.f32 %v793, %v811
    %v916 = vld [vmem:[%s2] sm:$0xf]
    %v918 = vlaneseq
    %v919 = vshrl.u32 %v918, 7
    %v920 = vsub.s32 0, %v919
    %v921 = vrot.slane %v916, %v920
    %v922 = vlaneseq
    %v923 = vshrl.u32 %v922, 7
    %v924 = vsub.s32 1, %v923
    %v925 = vrot.slane %v916, %v924
    %v926 = vlaneseq
    %v927 = vshrl.u32 %v926, 7
    %v928 = vsub.s32 2, %v927
    %v929 = vrot.slane %v916, %v928
    %v930 = vlaneseq
    %v931 = vshrl.u32 %v930, 7
    %v932 = vsub.s32 3, %v931
    %v933 = vrot.slane %v916, %v932
    %v938 = vadd.f32 %v816, %v921
    %v939 = vadd.f32 %v817, %v925
    %v940 = vadd.f32 %v818, %v929
    %v941 = vadd.f32 %v819, %v933
    %v942 = vadd.f32 %v820, %v921
    %v943 = vadd.f32 %v821, %v925
    %v944 = vadd.f32 %v822, %v929
    %v945 = vadd.f32 %v823, %v933
    %v946 = vadd.f32 %v824, %v921
    %v947 = vadd.f32 %v825, %v925
    %v948 = vadd.f32 %v826, %v929
    %v949 = vadd.f32 %v827, %v933
    %v950 = vadd.f32 %v828, %v921
    %v951 = vadd.f32 %v829, %v925
    %v952 = vadd.f32 %v830, %v929
    %v953 = vadd.f32 %v831, %v933
    %v954 = vadd.f32 %v832, %v921
    %v955 = vadd.f32 %v833, %v925
    %v956 = vadd.f32 %v834, %v929
    %v957 = vadd.f32 %v835, %v933
    %v958 = vadd.f32 %v836, %v921
    %v959 = vadd.f32 %v837, %v925
    %v960 = vadd.f32 %v838, %v929
    %v961 = vadd.f32 %v839, %v933
    %v962 = vadd.f32 %v840, %v921
    %v963 = vadd.f32 %v841, %v925
    %v964 = vadd.f32 %v842, %v929
    %v965 = vadd.f32 %v843, %v933
    %v966 = vadd.f32 %v844, %v921
    %v967 = vadd.f32 %v845, %v925
    %v968 = vadd.f32 %v846, %v929
    %v969 = vadd.f32 %v847, %v933
    %v970 = vadd.f32 %v848, %v921
    %v971 = vadd.f32 %v849, %v925
    %v972 = vadd.f32 %v850, %v929
    %v973 = vadd.f32 %v851, %v933
    %v974 = vadd.f32 %v852, %v921
    %v975 = vadd.f32 %v853, %v925
    %v976 = vadd.f32 %v854, %v929
    %v977 = vadd.f32 %v855, %v933
    %v978 = vadd.f32 %v856, %v921
    %v979 = vadd.f32 %v857, %v925
    %v980 = vadd.f32 %v858, %v929
    %v981 = vadd.f32 %v859, %v933
    %v982 = vadd.f32 %v860, %v921
    %v983 = vadd.f32 %v861, %v925
    %v984 = vadd.f32 %v862, %v929
    %v985 = vadd.f32 %v863, %v933
    %v986 = vadd.f32 %v864, %v921
    %v987 = vadd.f32 %v865, %v925
    %v988 = vadd.f32 %v866, %v929
    %v989 = vadd.f32 %v867, %v933
    %v990 = vadd.f32 %v868, %v921
    %v991 = vadd.f32 %v869, %v925
    %v992 = vadd.f32 %v870, %v929
    %v993 = vadd.f32 %v871, %v933
    %v994 = vadd.f32 %v872, %v921
    %v995 = vadd.f32 %v873, %v925
    %v996 = vadd.f32 %v874, %v929
    %v997 = vadd.f32 %v875, %v933
    %v998 = vadd.f32 %v876, %v921
    %v999 = vadd.f32 %v877, %v925
    %v1000 = vadd.f32 %v878, %v929
    %v1001 = vadd.f32 %v879, %v933
    %v1002 = vadd.f32 %v880, %v921
    %v1003 = vadd.f32 %v881, %v925
    %v1004 = vadd.f32 %v882, %v929
    %v1005 = vadd.f32 %v883, %v933
    %v1006 = vadd.f32 %v884, %v921
    %v1007 = vadd.f32 %v885, %v925
    %v1008 = vadd.f32 %v886, %v929
    %v1009 = vadd.f32 %v887, %v933
    %v1010 = vadd.f32 %v888, %v921
    %v1011 = vadd.f32 %v889, %v925
    %v1012 = vadd.f32 %v890, %v929
    %v1013 = vadd.f32 %v891, %v933
    %v1014 = vadd.f32 %v892, %v921
    %v1015 = vadd.f32 %v893, %v925
    %v1016 = vadd.f32 %v894, %v929
    %v1017 = vadd.f32 %v895, %v933
    %v1018 = vadd.f32 %v896, %v921
    %v1019 = vadd.f32 %v897, %v925
    %v1020 = vadd.f32 %v898, %v929
    %v1021 = vadd.f32 %v899, %v933
    %v1022 = vadd.f32 %v900, %v921
    %v1023 = vadd.f32 %v901, %v925
    %v1024 = vadd.f32 %v902, %v929
    %v1025 = vadd.f32 %v903, %v933
    %v1026 = vadd.f32 %v904, %v921
    %v1027 = vadd.f32 %v905, %v925
    %v1028 = vadd.f32 %v906, %v929
    %v1029 = vadd.f32 %v907, %v933
    %v1030 = vadd.f32 %v908, %v921
    %v1031 = vadd.f32 %v909, %v925
    %v1032 = vadd.f32 %v910, %v929
    %v1033 = vadd.f32 %v911, %v933
    %v1034 = vadd.f32 %v912, %v921
    %v1035 = vadd.f32 %v913, %v925
    %v1036 = vadd.f32 %v914, %v929
    %v1037 = vadd.f32 %v915, %v933
    %1038 = vst [vmem:[#allocation7] sm:$0xff] %v938
    %1039 = vst [vmem:[#allocation7 + $0x8] sm:$0xff] %v939
    %1040 = vst [vmem:[#allocation7 + $0x10] sm:$0xff] %v940
    %1041 = vst [vmem:[#allocation7 + $0x18] sm:$0xff] %v941
    %1042 = vst [vmem:[#allocation7 + $0x20] sm:$0xff] %v942
    %1043 = vst [vmem:[#allocation7 + $0x28] sm:$0xff] %v943
    %1044 = vst [vmem:[#allocation7 + $0x30] sm:$0xff] %v944
    %1045 = vst [vmem:[#allocation7 + $0x38] sm:$0xff] %v945
    %1046 = vst [vmem:[#allocation7 + $0x40] sm:$0xff] %v946
    %1047 = vst [vmem:[#allocation7 + $0x48] sm:$0xff] %v947
    %1048 = vst [vmem:[#allocation7 + $0x50] sm:$0xff] %v948
    %1049 = vst [vmem:[#allocation7 + $0x58] sm:$0xff] %v949
    %1050 = vst [vmem:[#allocation7 + $0x60] sm:$0xff] %v950
    %1051 = vst [vmem:[#allocation7 + $0x68] sm:$0xff] %v951
    %1052 = vst [vmem:[#allocation7 + $0x70] sm:$0xff] %v952
    %1053 = vst [vmem:[#allocation7 + $0x78] sm:$0xff] %v953
    %1054 = vst [vmem:[#allocation7 + $0x80] sm:$0xff] %v954
    %1055 = vst [vmem:[#allocation7 + $0x88] sm:$0xff] %v955
    %1056 = vst [vmem:[#allocation7 + $0x90] sm:$0xff] %v956
    %1057 = vst [vmem:[#allocation7 + $0x98] sm:$0xff] %v957
    %1058 = vst [vmem:[#allocation7 + $0xa0] sm:$0xff] %v958
    %1059 = vst [vmem:[#allocation7 + $0xa8] sm:$0xff] %v959
    %1060 = vst [vmem:[#allocation7 + $0xb0] sm:$0xff] %v960
    %1061 = vst [vmem:[#allocation7 + $0xb8] sm:$0xff] %v961
    %1062 = vst [vmem:[#allocation7 + $0xc0] sm:$0xff] %v962
    %1063 = vst [vmem:[#allocation7 + $0xc8] sm:$0xff] %v963
    %1064 = vst [vmem:[#allocation7 + $0xd0] sm:$0xff] %v964
    %1065 = vst [vmem:[#allocation7 + $0xd8] sm:$0xff] %v965
    %1066 = vst [vmem:[#allocation7 + $0xe0] sm:$0xff] %v966
    %1067 = vst [vmem:[#allocation7 + $0xe8] sm:$0xff] %v967
    %1068 = vst [vmem:[#allocation7 + $0xf0] sm:$0xff] %v968
    %1069 = vst [vmem:[#allocation7 + $0xf8] sm:$0xff] %v969
    %1070 = vst [vmem:[#allocation7 + $0x100] sm:$0xff] %v970
    %1071 = vst [vmem:[#allocation7 + $0x108] sm:$0xff] %v971
    %1072 = vst [vmem:[#allocation7 + $0x110] sm:$0xff] %v972
    %1073 = vst [vmem:[#allocation7 + $0x118] sm:$0xff] %v973
    %1074 = vst [vmem:[#allocation7 + $0x120] sm:$0xff] %v974
    %1075 = vst [vmem:[#allocation7 + $0x128] sm:$0xff] %v975
    %1076 = vst [vmem:[#allocation7 + $0x130] sm:$0xff] %v976
    %1077 = vst [vmem:[#allocation7 + $0x138] sm:$0xff] %v977
    %1078 = vst [vmem:[#allocation7 + $0x140] sm:$0xff] %v978
    %1079 = vst [vmem:[#allocation7 + $0x148] sm:$0xff] %v979
    %1080 = vst [vmem:[#allocation7 + $0x150] sm:$0xff] %v980
    %1081 = vst [vmem:[#allocation7 + $0x158] sm:$0xff] %v981
    %1082 = vst [vmem:[#allocation7 + $0x160] sm:$0xff] %v982
    %1083 = vst [vmem:[#allocation7 + $0x168] sm:$0xff] %v983
    %1084 = vst [vmem:[#allocation7 + $0x170] sm:$0xff] %v984
    %1085 = vst [vmem:[#allocation7 + $0x178] sm:$0xff] %v985
    %1086 = vst [vmem:[#allocation7 + $0x180] sm:$0xff] %v986
    %1087 = vst [vmem:[#allocation7 + $0x188] sm:$0xff] %v987
    %1088 = vst [vmem:[#allocation7 + $0x190] sm:$0xff] %v988
    %1089 = vst [vmem:[#allocation7 + $0x198] sm:$0xff] %v989
    %1090 = vst [vmem:[#allocation7 + $0x1a0] sm:$0xff] %v990
    %1091 = vst [vmem:[#allocation7 + $0x1a8] sm:$0xff] %v991
    %1092 = vst [vmem:[#allocation7 + $0x1b0] sm:$0xff] %v992
    %1093 = vst [vmem:[#allocation7 + $0x1b8] sm:$0xff] %v993
    %1094 = vst [vmem:[#allocation7 + $0x1c0] sm:$0xff] %v994
    %1095 = vst [vmem:[#allocation7 + $0x1c8] sm:$0xff] %v995
    %1096 = vst [vmem:[#allocation7 + $0x1d0] sm:$0xff] %v996
    %1097 = vst [vmem:[#allocation7 + $0x1d8] sm:$0xff] %v997
    %1098 = vst [vmem:[#allocation7 + $0x1e0] sm:$0xff] %v998
    %1099 = vst [vmem:[#allocation7 + $0x1e8] sm:$0xff] %v999
    %1100 = vst [vmem:[#allocation7 + $0x1f0] sm:$0xff] %v1000
    %1101 = vst [vmem:[#allocation7 + $0x1f8] sm:$0xff] %v1001
    %1102 = vst [vmem:[#allocation7 + $0x200] sm:$0xff] %v1002
    %1103 = vst [vmem:[#allocation7 + $0x208] sm:$0xff] %v1003
    %1104 = vst [vmem:[#allocation7 + $0x210] sm:$0xff] %v1004
    %1105 = vst [vmem:[#allocation7 + $0x218] sm:$0xff] %v1005
    %1106 = vst [vmem:[#allocation7 + $0x220] sm:$0xff] %v1006
    %1107 = vst [vmem:[#allocation7 + $0x228] sm:$0xff] %v1007
    %1108 = vst [vmem:[#allocation7 + $0x230] sm:$0xff] %v1008
    %1109 = vst [vmem:[#allocation7 + $0x238] sm:$0xff] %v1009
    %1110 = vst [vmem:[#allocation7 + $0x240] sm:$0xff] %v1010
    %1111 = vst [vmem:[#allocation7 + $0x248] sm:$0xff] %v1011
    %1112 = vst [vmem:[#allocation7 + $0x250] sm:$0xff] %v1012
    %1113 = vst [vmem:[#allocation7 + $0x258] sm:$0xff] %v1013
    %1114 = vst [vmem:[#allocation7 + $0x260] sm:$0xff] %v1014
    %1115 = vst [vmem:[#allocation7 + $0x268] sm:$0xff] %v1015
    %1116 = vst [vmem:[#allocation7 + $0x270] sm:$0xff] %v1016
    %1117 = vst [vmem:[#allocation7 + $0x278] sm:$0xff] %v1017
    %1118 = vst [vmem:[#allocation7 + $0x280] sm:$0xff] %v1018
    %1119 = vst [vmem:[#allocation7 + $0x288] sm:$0xff] %v1019
    %1120 = vst [vmem:[#allocation7 + $0x290] sm:$0xff] %v1020
    %1121 = vst [vmem:[#allocation7 + $0x298] sm:$0xff] %v1021
    %1122 = vst [vmem:[#allocation7 + $0x2a0] sm:$0xff] %v1022
    %1123 = vst [vmem:[#allocation7 + $0x2a8] sm:$0xff] %v1023
    %1124 = vst [vmem:[#allocation7 + $0x2b0] sm:$0xff] %v1024
    %1125 = vst [vmem:[#allocation7 + $0x2b8] sm:$0xff] %v1025
    %1126 = vst [vmem:[#allocation7 + $0x2c0] sm:$0xff] %v1026
    %1127 = vst [vmem:[#allocation7 + $0x2c8] sm:$0xff] %v1027
    %1128 = vst [vmem:[#allocation7 + $0x2d0] sm:$0xff] %v1028
    %1129 = vst [vmem:[#allocation7 + $0x2d8] sm:$0xff] %v1029
    %1130 = vst [vmem:[#allocation7 + $0x2e0] sm:$0xff] %v1030
    %1131 = vst [vmem:[#allocation7 + $0x2e8] sm:$0xff] %v1031
    %1132 = vst [vmem:[#allocation7 + $0x2f0] sm:$0xff] %v1032
    %1133 = vst [vmem:[#allocation7 + $0x2f8] sm:$0xff] %v1033
    %1134 = vst [vmem:[#allocation7 + $0x300] sm:$0xf] %v1034
    %1135 = vst [vmem:[#allocation7 + $0x308] sm:$0xf] %v1035
    %1136 = vst [vmem:[#allocation7 + $0x310] sm:$0xf] %v1036
    %1137 = vst [vmem:[#allocation7 + $0x318] sm:$0xf] %v1037
    // Predicated region
    $region22: #{tpu_custom_call.1} parent=1 // pred_check
      _
    $region23: #{tpu_custom_call.1} parent=1 // pred_check_branch
      %1139 = sbr.rel (0) target = $region25
    $region24: #{tpu_custom_call.1} parent=1 // pred_region
      %s1141 = ssub.s32 12800, 12800
      %1142 = vsyncadd [#allocation4], %s1141
      %s1143 = sshll.u32 [#allocation7], 4
      %s1144 = int_to_ptr.vmem [resolvable:$true] %s1143
      %1149 = dma.vmem_to_hbm [thread:$0]  %s1144, 12800, %s3, [#allocation4], 512, 512, 32
    $region25: #{tpu_custom_call.1} parent=1 // pred_fallthru
      _
    // Predicated region
    $region26: #{tpu_custom_call.1} parent=1 // pred_check
      _
    $region27: #{tpu_custom_call.1} parent=1 // pred_check_branch
      %1151 = sbr.rel (0) target = $region29
    $region28: #{tpu_custom_call.1} parent=1 // pred_region
      %1152 = dma.done [#allocation4], 12800
    $region29: #{tpu_custom_call.1} parent=1 // pred_fallthru
      _
    %1153 = vsyncpa [#allocation3], 1
    %1154 = vsyncpa [#allocation6], 1
    %1155 = vsyncpa [#allocation4], 1

</llo_original>
